<compile_context>
chip_gen: v7x
topology: tpu7x:2x2x1
jax: 0.10.0
libtpu: 0.0.40
codegen_flags: <defaults>
</compile_context>

<pallas_src>
import functools

import jax
import jax.numpy as jnp
from jax.experimental import pallas as pl
from jax.experimental.pallas import tpu as pltpu


_ROW_TILE_CAP = 1024      # rows of N = B*T per grid step (sweep 512/1024/2048)
_NEG_INF = -1e30          # column-padding value baked into the table


def _round_up(x, m):
    return ((x + m - 1) // m) * m


# ---------------------------------------------------------------------------
# Kernels
# ---------------------------------------------------------------------------
def _logits_kernel(idx_ref, table_ref, logits_ref):
    """Embedding gather as a lane-dense one-hot matmul; store only [:, :V].

    idx_ref:    (TN, 1)        int32 token ids for this row tile
    table_ref:  (V_pad, V_pad) f32 padded table (VMEM-resident across the grid)
    logits_ref: (TN, V)        f32 output tile (V = true vocab size)
    """
    tn = idx_ref.shape[0]
    v_pad = table_ref.shape[1]
    n_vocab = logits_ref.shape[1]

    col = jax.lax.broadcasted_iota(jnp.int32, (tn, v_pad), 1)
    one_hot = (col == idx_ref[...]).astype(jnp.float32)          # exact 0/1
    logits = jnp.dot(one_hot, table_ref[...],
                     preferred_element_type=jnp.float32)         # (TN, V_pad)
    logits_ref[...] = logits[:, :n_vocab]


def _loss_rows(ids_ref, table_ref, n_rows, tn, v_pad):
    """Shared body: returns (logits (TN, V_pad), per-row loss (TN, 1))."""
    step = pl.program_id(0)
    ids = ids_ref[...]                                           # (TN, 2)
    idx = ids[:, 0:1]                                            # (TN, 1)
    tgt = ids[:, 1:2]                                            # (TN, 1)

    col = jax.lax.broadcasted_iota(jnp.int32, (tn, v_pad), 1)
    one_hot = (col == idx).astype(jnp.float32)
    logits = jnp.dot(one_hot, table_ref[...],
                     preferred_element_type=jnp.float32)         # (TN, V_pad)

    # Padded vocab columns carry -1e30 (baked into the table), so they drop out of
    # the softmax statistics without an extra compare+select temporary here.
    m = jnp.max(logits, axis=-1, keepdims=True)                  # (TN, 1)
    lse = m + jnp.log(jnp.sum(jnp.exp(logits - m), axis=-1, keepdims=True))
    tgt_logit = jnp.sum(jnp.where(col == tgt, logits, 0.0),
                        axis=-1, keepdims=True)                  # (TN, 1)

    # Rows beyond the real N (grid padding) contribute exactly zero.
    row = jax.lax.broadcasted_iota(jnp.int32, (tn, 1), 0) + step * tn
    row_valid = (row < n_rows).astype(jnp.float32)
    return logits, (lse - tgt_logit) * row_valid


def _loss_kernel(ids_ref, table_ref, logits_ref, loss_ref, *, n_rows):
    """Gather + per-row cross-entropy; writes logits tile and per-row losses."""
    tn = ids_ref.shape[0]
    v_pad = table_ref.shape[1]
    logits, rows = _loss_rows(ids_ref, table_ref, n_rows, tn, v_pad)
    logits_ref[...] = logits[:, :logits_ref.shape[1]]
    loss_ref[...] = rows


def _loss_only_kernel(ids_ref, table_ref, loss_ref, *, n_rows):
    """Per-row cross-entropy only (skips the N*V logits writeback entirely)."""
    tn = ids_ref.shape[0]
    v_pad = table_ref.shape[1]
    _, rows = _loss_rows(ids_ref, table_ref, n_rows, tn, v_pad)
    loss_ref[...] = rows


# ---------------------------------------------------------------------------
# Wrappers (padding / flattening / reshaping stays in plain JAX)
# ---------------------------------------------------------------------------
def _tiling(n):
    tn = min(_ROW_TILE_CAP, _round_up(n, 8))
    num_tiles = _round_up(n, tn) // tn
    return tn, num_tiles, num_tiles * tn


def _pad_table(table, v_pad):
    # Columns [V:V_pad] are -1e30 so padded lanes vanish from softmax stats.
    # They are never stored (kernel output last dim is V), so callers never see it.
    v = table.shape[0]
    tp = jnp.full((v_pad, v_pad), jnp.float32(_NEG_INF))
    return tp.at[:v, :v].set(table.astype(jnp.float32))


def _pack_ids(idx, targets, n, n_pad):
    ids = jnp.zeros((n_pad, 2), jnp.int32)
    ids = ids.at[:n, 0].set(idx.reshape(n).astype(jnp.int32))
    ids = ids.at[:n, 1].set(targets.reshape(n).astype(jnp.int32))
    return ids


def bigram_forward(table, idx, targets=None):
    """Forward pass of BigramLanguageModel.

    table:   (V, V) float32 embedding table
    idx:     (B, T) int32
    targets: (B, T) int32 or None

    Returns (logits, loss):
      targets is None -> logits (B, T, V), loss None
      else            -> logits (B*T, V),  loss scalar f32
    """
    V = table.shape[0]
    B, T = idx.shape
    N = B * T
    V_pad = _round_up(V, 128)
    TN, num_tiles, N_pad = _tiling(N)

    table_pad = _pad_table(table, V_pad)
    table_spec = pl.BlockSpec((V_pad, V_pad), lambda i: (0, 0))   # VMEM-resident
    logits_spec = pl.BlockSpec((TN, V), lambda i: (i, 0))         # no post-slice
    params = pltpu.CompilerParams(dimension_semantics=("parallel",))

    if targets is None:
        idx_flat = jnp.zeros((N_pad, 1), jnp.int32).at[:N, 0].set(
            idx.reshape(N).astype(jnp.int32))
        logits_pad = pl.pallas_call(
            _logits_kernel,
            out_shape=jax.ShapeDtypeStruct((N_pad, V), jnp.float32),
            grid_spec=pltpu.PrefetchScalarGridSpec(
                num_scalar_prefetch=0,
                grid=(num_tiles,),
                in_specs=[pl.BlockSpec((TN, 1), lambda i: (i, 0)), table_spec],
                out_specs=logits_spec),
            compiler_params=params,
            cost_estimate=pl.CostEstimate(
                flops=2 * N_pad * V_pad * V_pad,
                transcendentals=0,
                bytes_accessed=N_pad * 4 + V_pad * V_pad * 4 + N_pad * V * 4),
        )(idx_flat, table_pad)
        logits = logits_pad if N_pad == N else logits_pad[:N]
        return logits.reshape(B, T, V), None

    ids = _pack_ids(idx, targets, N, N_pad)
    kernel = functools.partial(_loss_kernel, n_rows=N)
    logits_pad, loss_rows = pl.pallas_call(
        kernel,
        out_shape=(jax.ShapeDtypeStruct((N_pad, V), jnp.float32),
                   jax.ShapeDtypeStruct((N_pad, 1), jnp.float32)),
        grid_spec=pltpu.PrefetchScalarGridSpec(
            num_scalar_prefetch=0,
            grid=(num_tiles,),
            in_specs=[pl.BlockSpec((TN, 2), lambda i: (i, 0)), table_spec],
            out_specs=(logits_spec, pl.BlockSpec((TN, 1), lambda i: (i, 0)))),
        compiler_params=params,
        cost_estimate=pl.CostEstimate(
            flops=2 * N_pad * V_pad * V_pad + 6 * N_pad * V_pad,
            transcendentals=N_pad * V_pad + N_pad,
            bytes_accessed=(N_pad * 8 + V_pad * V_pad * 4
                            + N_pad * V * 4 + N_pad * 4)),
    )(ids, table_pad)
    loss = jnp.sum(loss_rows) / jnp.float32(N)
    logits = logits_pad if N_pad == N else logits_pad[:N]
    return logits, loss


def bigram_loss(table, idx, targets):
    """Scalar cross-entropy only — omits the N*V logits writeback (training path)."""
    V = table.shape[0]
    B, T = idx.shape
    N = B * T
    V_pad = _round_up(V, 128)
    TN, num_tiles, N_pad = _tiling(N)

    table_pad = _pad_table(table, V_pad)
    ids = _pack_ids(idx, targets, N, N_pad)
    kernel = functools.partial(_loss_only_kernel, n_rows=N)
    loss_rows = pl.pallas_call(
        kernel,
        out_shape=jax.ShapeDtypeStruct((N_pad, 1), jnp.float32),
        grid_spec=pltpu.PrefetchScalarGridSpec(
            num_scalar_prefetch=0,
            grid=(num_tiles,),
            in_specs=[pl.BlockSpec((TN, 2), lambda i: (i, 0)),
                      pl.BlockSpec((V_pad, V_pad), lambda i: (0, 0))],
            out_specs=pl.BlockSpec((TN, 1), lambda i: (i, 0))),
        compiler_params=pltpu.CompilerParams(dimension_semantics=("parallel",)),
        cost_estimate=pl.CostEstimate(
            flops=2 * N_pad * V_pad * V_pad + 6 * N_pad * V_pad,
            transcendentals=N_pad * V_pad + N_pad,
            bytes_accessed=N_pad * 8 + V_pad * V_pad * 4 + N_pad * 4),
    )(ids, table_pad)
    return jnp.sum(loss_rows) / jnp.float32(N)


# ---------------------------------------------------------------------------
# Main
# ---------------------------------------------------------------------------
if __name__ == "__main__":
    key = jax.random.PRNGKey(0)
    k_table, k_idx, k_tgt = jax.random.split(key, 3)

    vocab_size = 65       # e.g. tiny-shakespeare sized vocab
    B, T = 2, 8           # small batch / sequence

    # Deterministic "nn.Embedding(vocab_size, vocab_size)" weight init (~N(0,1)).
    table = jax.random.normal(k_table, (vocab_size, vocab_size), dtype=jnp.float32)
    idx = jax.random.randint(k_idx, (B, T), 0, vocab_size, dtype=jnp.int32)
    targets = jax.random.randint(k_tgt, (B, T), 0, vocab_size, dtype=jnp.int32)

    # Path with targets: (B*T, V) logits + scalar cross-entropy loss.
    logits, loss = bigram_forward(table, idx, targets)
    logits = jax.block_until_ready(logits)
    loss = jax.block_until_ready(loss)

    # Path without targets: (B, T, V) logits, loss is None.
    logits_nt, loss_nt = bigram_forward(table, idx, None)
    logits_nt = jax.block_until_ready(logits_nt)

    # Loss-only training path (no logits writeback).
    loss_only = jax.block_until_ready(bigram_loss(table, idx, targets))

    # Lightweight correctness check against a pure-JAX reference.
    ref_logits = table[idx.reshape(-1)]                              # (B*T, V)
    ref_lse = jax.scipy.special.logsumexp(ref_logits, axis=-1)
    ref_tgt = ref_logits[jnp.arange(B * T), targets.reshape(-1)]
    ref_loss = jnp.mean(ref_lse - ref_tgt)

    assert logits.shape == (B * T, vocab_size)
    assert logits_nt.shape == (B, T, vocab_size)
    assert loss_nt is None
    assert jnp.allclose(logits, ref_logits, atol=1e-5)
    assert jnp.allclose(logits_nt.reshape(B * T, vocab_size), ref_logits, atol=1e-5)
    assert jnp.allclose(loss, ref_loss, atol=1e-5)
    assert jnp.allclose(loss_only, ref_loss, atol=1e-5)

    # TODO(synk): `generate()` (autoregressive multinomial sampling loop) is
    # host-side control flow, not a kernel hot path; only forward is implemented.
    print("KERNEL_OK")
</pallas_src>

<mosaic_0001>
module attributes {stable_mosaic.version = 11 : i64} {
  func.func @_loss_kernel(%arg0: i32, %arg1: memref<16x2xi32, #tpu.memory_space<vmem>>, %arg2: memref<128x128xf32, #tpu.memory_space<vmem>>, %arg3: memref<16x65xf32, #tpu.memory_space<vmem>>, %arg4: memref<16x1xf32, #tpu.memory_space<vmem>>) attributes {dimension_semantics = [#tpu.dimension_semantics<parallel>], iteration_bounds = array<i64: 1>, scalar_prefetch = 0 : i64, scratch_operands = 0 : i64, tpu.core_type = #tpu.core_type<tc>, window_params = [{transform_indices = @transform_0, window_bounds = array<i64: 16, 2>}, {pipeline_mode = #tpu.pipeline_mode<synchronous>, transform_indices = @transform_1, window_bounds = array<i64: 128, 128>}, {transform_indices = @transform_2, window_bounds = array<i64: 16, 65>}, {transform_indices = @transform_3, window_bounds = array<i64: 16, 1>}]} {
    %c0 = arith.constant 0 : index
    %c0_0 = arith.constant 0 : index
    %0 = vector.load %arg1[%c0, %c0_0] : memref<16x2xi32, #tpu.memory_space<vmem>>, vector<16x2xi32>
    %1 = vector.extract_strided_slice %0 {offsets = [0, 0], sizes = [16, 1], strides = [1, 1]} : vector<16x2xi32> to vector<16x1xi32>
    %2 = vector.extract_strided_slice %0 {offsets = [0, 1], sizes = [16, 1], strides = [1, 1]} : vector<16x2xi32> to vector<16x1xi32>
    %3 = tpu.iota {dimensions = array<i32: 1>} : vector<16x128xi32>
    %4 = vector.broadcast %1 : vector<16x1xi32> to vector<16x128xi32>
    %5 = arith.cmpi eq, %3, %4 : vector<16x128xi32>
    %6 = arith.extui %5 : vector<16x128xi1> to vector<16x128xi32>
    %7 = arith.sitofp %6 : vector<16x128xi32> to vector<16x128xf32>
    %c0_1 = arith.constant 0 : index
    %c0_2 = arith.constant 0 : index
    %8 = vector.load %arg2[%c0_1, %c0_2] : memref<128x128xf32, #tpu.memory_space<vmem>>, vector<128x128xf32>
    %cst = arith.constant dense<0.000000e+00> : vector<16x128xf32>
    %9 = tpu.matmul %7, %8, %cst {dimension_numbers = #tpu.dot_dimension_numbers<[1], [0], [0], [1], [0, 0, 1, 1], [], []>} : vector<16x128xf32>, vector<128x128xf32>, vector<16x128xf32> -> vector<16x128xf32>
    %cst_3 = arith.constant dense<0xFF800000> : vector<16xf32>
    %10 = vector.multi_reduction <maximumf>, %9, %cst_3 [1] : vector<16x128xf32> to vector<16xf32>
    %11 = vector.shape_cast %10 : vector<16xf32> to vector<16x1xf32>
    %12 = vector.broadcast %11 : vector<16x1xf32> to vector<16x128xf32>
    %13 = arith.subf %9, %12 : vector<16x128xf32>
    %14 = math.exp %13 : vector<16x128xf32>
    %cst_4 = arith.constant dense<0.000000e+00> : vector<16xf32>
    %15 = vector.multi_reduction <add>, %14, %cst_4 [1] : vector<16x128xf32> to vector<16xf32>
    %16 = vector.shape_cast %15 : vector<16xf32> to vector<16x1xf32>
    %17 = math.log %16 : vector<16x1xf32>
    %18 = arith.addf %11, %17 : vector<16x1xf32>
    %19 = vector.broadcast %2 : vector<16x1xi32> to vector<16x128xi32>
    %20 = arith.cmpi eq, %3, %19 : vector<16x128xi32>
    %cst_5 = arith.constant 0.000000e+00 : f32
    %21 = vector.broadcast %cst_5 : f32 to vector<16x128xf32>
    %22 = arith.select %20, %9, %21 : vector<16x128xi1>, vector<16x128xf32>
    %cst_6 = arith.constant dense<0.000000e+00> : vector<16xf32>
    %23 = vector.multi_reduction <add>, %22, %cst_6 [1] : vector<16x128xf32> to vector<16xf32>
    %24 = vector.shape_cast %23 : vector<16xf32> to vector<16x1xf32>
    %25 = tpu.iota {dimensions = array<i32: 0>} : vector<16x1xi32>
    %c16_i32 = arith.constant 16 : i32
    %26 = arith.muli %arg0, %c16_i32 : i32
    %27 = vector.broadcast %26 : i32 to vector<16x1xi32>
    %28 = arith.addi %25, %27 : vector<16x1xi32>
    %c16_i32_7 = arith.constant 16 : i32
    %29 = vector.broadcast %c16_i32_7 : i32 to vector<16x1xi32>
    %30 = arith.cmpi slt, %28, %29 : vector<16x1xi32>
    %31 = arith.extui %30 : vector<16x1xi1> to vector<16x1xi32>
    %32 = arith.sitofp %31 : vector<16x1xi32> to vector<16x1xf32>
    %33 = arith.subf %18, %24 : vector<16x1xf32>
    %34 = arith.mulf %33, %32 : vector<16x1xf32>
    %35 = vector.extract_strided_slice %9 {offsets = [0, 0], sizes = [16, 65], strides = [1, 1]} : vector<16x128xf32> to vector<16x65xf32>
    %c0_8 = arith.constant 0 : index
    %c0_9 = arith.constant 0 : index
    %36 = vector.load %arg3[%c0_8, %c0_9] : memref<16x65xf32, #tpu.memory_space<vmem>>, vector<16x65xf32>
    tpu.vector_store %arg3[%c0_8, %c0_9], %35 {strides = array<i32>} : memref<16x65xf32, #tpu.memory_space<vmem>>, vector<16x65xf32>,
    %c0_10 = arith.constant 0 : index
    %c0_11 = arith.constant 0 : index
    %37 = vector.load %arg4[%c0_10, %c0_11] : memref<16x1xf32, #tpu.memory_space<vmem>>, vector<16x1xf32>
    tpu.vector_store %arg4[%c0_10, %c0_11], %34 {strides = array<i32>} : memref<16x1xf32, #tpu.memory_space<vmem>>, vector<16x1xf32>,
    return
  }
  func.func @transform_0(%arg0: i32) -> (i32, i32) {
    %c0_i32 = arith.constant 0 : i32
    %c0_i32_0 = arith.constant 0 : i32
    return %arg0, %c0_i32 : i32, i32
  }
  func.func @transform_1(%arg0: i32) -> (i32, i32) {
    %c0_i32 = arith.constant 0 : i32
    %c0_i32_0 = arith.constant 0 : i32
    %c0_i32_1 = arith.constant 0 : i32
    return %c0_i32, %c0_i32_0 : i32, i32
  }
  func.func @transform_2(%arg0: i32) -> (i32, i32) {
    %c0_i32 = arith.constant 0 : i32
    %c0_i32_0 = arith.constant 0 : i32
    return %arg0, %c0_i32 : i32, i32
  }
  func.func @transform_3(%arg0: i32) -> (i32, i32) {
    %c0_i32 = arith.constant 0 : i32
    %c0_i32_0 = arith.constant 0 : i32
    return %arg0, %c0_i32 : i32, i32
  }
}

</mosaic_0001>

<llo_original>
// kernel: tpu_custom_call.1
$region0: #{tpu_custom_call.1}
  #allocation0 [shape = 'u32[]', space=smem, size = 0x4, offset = 0x4, fixed_abs, tag = 'smem constant byte address 0x4 - core index']
  #allocation1 [shape = 'u32[144,128]{1,0:T(1,128)}', space=vmem, size = 0x12000, scoped, tag = 'internal scratch']
  %s0 = inlined_call_operand.vmem [shape: s32[16,2], index: 0, kind: input, shape index: {}]
  %s1 = inlined_call_operand.hbm [shape: f32[128,128], index: 1, kind: input, shape index: {}]
  %s2 = inlined_call_operand.hbm [shape: f32[16,65], index: 2, kind: output, shape index: {0}]
  %s3 = inlined_call_operand.vmem [shape: f32[16,1], index: 3, kind: output, shape index: {1}]
  %4 = xla_tuple %s2, %s3
  %s5 = sld [smem:[#allocation0]]
  $region30: #{tpu_custom_call.1} parent=0
    _
  %s7 = ssub.s32 1, %s5
  %s8 = scalar_select 0, %s7, %s5
  $region1: #{tpu_custom_call.1} parent=0
    #allocation2 [shape = 'u8[65536]{0}', space=vmem, size = 0x10000, scoped, tag = 'input window, operand 1, single buffered']
    #allocation3 [shape = 's32[1]{0}', space=sflag, size = 0x4, scoped, tag = 'scoped memory for tpu_custom_call.1']
    #allocation4 [shape = 's32[1]{0}', space=sflag, size = 0x4, scoped, tag = 'scoped memory for tpu_custom_call.1']
    #allocation5 [shape = 'u8[8192]{0}', space=vmem, size = 0x2000, scoped, tag = 'output window, operand 0, single buffered']
    %9 = vsyncpa [#allocation3], 0
    %10 = vsyncpa [#allocation4], 0
    // Predicated region
    $region2: #{tpu_custom_call.1} parent=1 // pred_check
      _
    $region3: #{tpu_custom_call.1} parent=1 // pred_check_branch
      %12 = sbr.rel (0) target = $region5
    $region4: #{tpu_custom_call.1} parent=1 // pred_region
      _
    $region5: #{tpu_custom_call.1} parent=1 // pred_fallthru
      _
    // Predicated region
    $region6: #{tpu_custom_call.1} parent=1 // pred_check
      _
    $region7: #{tpu_custom_call.1} parent=1 // pred_check_branch
      %14 = sbr.rel (0) target = $region9
    $region8: #{tpu_custom_call.1} parent=1 // pred_region
      %s16 = ssub.s32 2048, 2048
      %17 = vsyncadd [#allocation3], %s16
      %s18 = sshll.u32 [#allocation2], 4
      %s19 = int_to_ptr.vmem [resolvable:$true] %s18
      %24 = dma.hbm_to_vmem [thread:$0]  %s1, 2048, %s19, [#allocation3], 128, 128, 8
    $region9: #{tpu_custom_call.1} parent=1 // pred_fallthru
      _
    // Predicated region
    $region10: #{tpu_custom_call.1} parent=1 // pred_check
      _
    $region11: #{tpu_custom_call.1} parent=1 // pred_check_branch
      %26 = sbr.rel (0) target = $region13
    $region12: #{tpu_custom_call.1} parent=1 // pred_region
      %27 = dma.done [#allocation3], 2048
    $region13: #{tpu_custom_call.1} parent=1 // pred_fallthru
      _
    %v28 = vld [vmem:[%s0] sm:$0xff]
    %v29 = vld [vmem:[%s0 + $0x8] sm:$0xff]
    %v30 = vlaneseq
    %v31 = vand.u32 %v30, 127
    %32 = vset.pattern.permute.xlu0 0
    %33 = vperm.xlu0 %32, %v28
    %v34 = vpop.permute.xlu0 %33
    %35 = vset.pattern.permute.xlu0 0
    %36 = vperm.xlu0 %35, %v29
    %v37 = vpop.permute.xlu0 %36
    %vm38 = vcmp.eq.s32.totalorder %v31, %v34
    %vm39 = vcmp.eq.s32.totalorder %v31, %v37
    %v40 = vsel %vm38, 1, 0
    %v41 = vsel %vm39, 1, 0
    %v42 = vcvt.s32.f32 %v40
    %v43 = vcvt.s32.f32 %v41
    %v44 = vld [vmem:[#allocation2] sm:$0xff]
    %v45 = vld [vmem:[#allocation2 + $0x8] sm:$0xff]
    %v46 = vld [vmem:[#allocation2 + $0x10] sm:$0xff]
    %v47 = vld [vmem:[#allocation2 + $0x18] sm:$0xff]
    %v48 = vld [vmem:[#allocation2 + $0x20] sm:$0xff]
    %v49 = vld [vmem:[#allocation2 + $0x28] sm:$0xff]
    %v50 = vld [vmem:[#allocation2 + $0x30] sm:$0xff]
    %v51 = vld [vmem:[#allocation2 + $0x38] sm:$0xff]
    %v52 = vld [vmem:[#allocation2 + $0x40] sm:$0xff]
    %v53 = vld [vmem:[#allocation2 + $0x48] sm:$0xff]
    %v54 = vld [vmem:[#allocation2 + $0x50] sm:$0xff]
    %v55 = vld [vmem:[#allocation2 + $0x58] sm:$0xff]
    %v56 = vld [vmem:[#allocation2 + $0x60] sm:$0xff]
    %v57 = vld [vmem:[#allocation2 + $0x68] sm:$0xff]
    %v58 = vld [vmem:[#allocation2 + $0x70] sm:$0xff]
    %v59 = vld [vmem:[#allocation2 + $0x78] sm:$0xff]
    %60 = vmatprep.subr.mxu0 0.0
    %61 = vmatpush1.msra.mxu0 %v44
    %62 = vmatprep.subr.mxu0 0.0
    %63 = vmatpush1.msra.mxu0 %v45
    %64 = vmatprep.subr.mxu0 0.0
    %65 = vmatpush1.msra.mxu0 %v46
    %66 = vmatprep.subr.mxu0 0.0
    %67 = vmatpush1.msra.mxu0 %v47
    %68 = vmatprep.subr.mxu0 0.0
    %69 = vmatpush1.msra.mxu0 %v48
    %70 = vmatprep.subr.mxu0 0.0
    %71 = vmatpush1.msra.mxu0 %v49
    %72 = vmatprep.subr.mxu0 0.0
    %73 = vmatpush1.msra.mxu0 %v50
    %74 = vmatprep.subr.mxu0 0.0
    %75 = vmatpush1.msra.mxu0 %v51
    %76 = vmatprep.subr.mxu0 0.0
    %77 = vmatpush1.msra.mxu0 %v52
    %78 = vmatprep.subr.mxu0 0.0
    %79 = vmatpush1.msra.mxu0 %v53
    %80 = vmatprep.subr.mxu0 0.0
    %81 = vmatpush1.msra.mxu0 %v54
    %82 = vmatprep.subr.mxu0 0.0
    %83 = vmatpush1.msra.mxu0 %v55
    %84 = vmatprep.subr.mxu0 0.0
    %85 = vmatpush1.msra.mxu0 %v56
    %86 = vmatprep.subr.mxu0 0.0
    %87 = vmatpush1.msra.mxu0 %v57
    %88 = vmatprep.subr.mxu0 0.0
    %89 = vmatpush1.msra.mxu0 %v58
    %90 = vmatprep.subr.mxu0 0.0
    %91 = vmatpush1.msra.mxu0 %v59
    %92 = vmatprep.subr.mxu0 0.0
    %93 = vmatpush1.msra.mxu0 0.0
    %94 = vmatprep.subr.mxu0 0.0
    %95 = vmatpush1.msra.mxu0 0.0
    %96 = vmatprep.subr.mxu0 0.0
    %97 = vmatpush1.msra.mxu0 0.0
    %98 = vmatprep.subr.mxu0 0.0
    %99 = vmatpush1.msra.mxu0 0.0
    %100 = vmatprep.subr.mxu0 0.0
    %101 = vmatpush1.msra.mxu0 0.0
    %102 = vmatprep.subr.mxu0 0.0
    %103 = vmatpush1.msra.mxu0 0.0
    %104 = vmatprep.subr.mxu0 0.0
    %105 = vmatpush1.msra.mxu0 0.0
    %106 = vmatprep.subr.mxu0 0.0
    %107 = vmatpush1.msra.mxu0 0.0
    %108 = vmatprep.subr.mxu0 0.0
    %109 = vmatpush1.msra.mxu0 0.0
    %110 = vmatprep.subr.mxu0 0.0
    %111 = vmatpush1.msra.mxu0 0.0
    %112 = vmatprep.subr.mxu0 0.0
    %113 = vmatpush1.msra.mxu0 0.0
    %114 = vmatprep.subr.mxu0 0.0
    %115 = vmatpush1.msra.mxu0 0.0
    %116 = vmatprep.subr.mxu0 0.0
    %117 = vmatpush1.msra.mxu0 0.0
    %118 = vmatprep.subr.mxu0 0.0
    %119 = vmatpush1.msra.mxu0 0.0
    %120 = vmatprep.subr.mxu0 0.0
    %121 = vmatpush1.msra.mxu0 0.0
    %122 = vmatprep.subr.mxu0 0.0
    %123 = vmatpush1.msra.mxu0 0.0
    %124 = vmatprep.mubr.f32.mxu0 0.0
    %125 = vmatmul.mubr.f32.gmra.mrb[0].mxu0 %v42
    %v126 = vpop.f32.mrb[0].mxu0
    %v127 = vadd.f32 0.0, %v126
    %v128 = vpop.f32.mrb[0].mxu0
    %129 = vmatprep.mubr.f32.mxu0 0.0
    %130 = vmatmul.mubr.f32.gmra.mrb[0].mxu0 %v43
    %v131 = vpop.f32.mrb[0].mxu0
    %v132 = vadd.f32 0.0, %v131
    %v133 = vpop.f32.mrb[0].mxu0
    %134 = vdwg.mxu0
    %135 = vmax.xlane.f32.xlu0 %v127
    %v136 = vpop.xlane.xlu0 %135
    %137 = vmax.xlane.f32.xlu0 %v132
    %v138 = vpop.xlane.xlu0 %137
    %v139 = vsub.f32 %v127, %v136
    %v140 = vsub.f32 %v132, %v138
    %v141 = vmul.f32 %v139, 1.442695
    %v142 = vpow.pop %v141
    %v143 = vmul.f32 %v140, 1.442695
    %v144 = vpow.pop %v143
    %145 = vadd.xlane.f32.xlu0 %v142
    %v146 = vpop.xlane.xlu0 %145
    %147 = vadd.xlane.f32.xlu0 %v144
    %v148 = vpop.xlane.xlu0 %147
    %v149 = vlog2.pop %v146
    %v150 = vmul.f32 %v149, 0.6931472
    %v151 = vlog2.pop %v148
    %v152 = vmul.f32 %v151, 0.6931472
    %v153 = vadd.f32 %v136, %v150
    %v154 = vadd.f32 %v138, %v152
    %155 = vset.pattern.permute.xlu0 1
    %156 = vperm.xlu0 %155, %v28
    %v157 = vpop.permute.xlu0 %156
    %158 = vset.pattern.permute.xlu0 1
    %159 = vperm.xlu0 %158, %v29
    %v160 = vpop.permute.xlu0 %159
    %vm161 = vcmp.eq.s32.totalorder %v31, %v157
    %vm162 = vcmp.eq.s32.totalorder %v31, %v160
    %v163 = vsel %vm161, %v127, 0.0
    %v164 = vsel %vm162, %v132, 0.0
    %165 = vadd.xlane.f32.xlu0 %v163
    %v166 = vpop.xlane.xlu0 %165
    %167 = vadd.xlane.f32.xlu0 %v164
    %v168 = vpop.xlane.xlu0 %167
    %v169 = vlaneseq
    %v170 = vshrl.u32 %v169, 7
    %v171 = vadd.s32 %v170, 8
    %s172 = smul.u32 0, 16
    %v173 = vstv %s172
    %v174 = vadd.s32 %v170, %v173
    %v175 = vadd.s32 %v171, %v173
    %vm176 = vcmp.lt.s32.totalorder %v174, 16
    %vm177 = vcmp.lt.s32.totalorder %v175, 16
    %v178 = vsel %vm176, 1, 0
    %v179 = vsel %vm177, 1, 0
    %v180 = vcvt.s32.f32 %v178
    %v181 = vcvt.s32.f32 %v179
    %v182 = vsub.f32 %v153, %v166
    %v183 = vsub.f32 %v154, %v168
    %v184 = vmul.f32 %v182, %v180
    %v185 = vmul.f32 %v183, %v181
    %vm186 = vcmask 531456
    %187 = vst.msk [vmem:[#allocation5] sm:$0xff] %vm186, %v127
    %188 = vst.msk [vmem:[#allocation5 + $0x8] sm:$0xff] %vm186, %v132
    %vm189 = vcmask 7168
    %190 = vst.msk [vmem:[%s3] sm:$0xff] %vm189, %v184
    %191 = vst.msk [vmem:[%s3 + $0x8] sm:$0xff] %vm189, %v185
    // Predicated region
    $region14: #{tpu_custom_call.1} parent=1 // pred_check
      _
    $region15: #{tpu_custom_call.1} parent=1 // pred_check_branch
      %193 = sbr.rel (0) target = $region17
    $region16: #{tpu_custom_call.1} parent=1 // pred_region
      %s195 = ssub.s32 256, 256
      %196 = vsyncadd [#allocation4], %s195
      %s197 = sshll.u32 [#allocation5], 4
      %s198 = int_to_ptr.vmem [resolvable:$true] %s197
      %203 = dma.vmem_to_hbm [thread:$0]  %s198, 256, %s2, [#allocation4], 128, 128, 8
    $region17: #{tpu_custom_call.1} parent=1 // pred_fallthru
      _
    // Predicated region
    $region18: #{tpu_custom_call.1} parent=1 // pred_check
      _
    $region19: #{tpu_custom_call.1} parent=1 // pred_check_branch
      %205 = sbr.rel (0) target = $region21
    $region20: #{tpu_custom_call.1} parent=1 // pred_region
      _
    $region21: #{tpu_custom_call.1} parent=1 // pred_fallthru
      _
    // Predicated region
    $region22: #{tpu_custom_call.1} parent=1 // pred_check
      _
    $region23: #{tpu_custom_call.1} parent=1 // pred_check_branch
      %207 = sbr.rel (0) target = $region25
    $region24: #{tpu_custom_call.1} parent=1 // pred_region
      %208 = dma.done [#allocation4], 256
    $region25: #{tpu_custom_call.1} parent=1 // pred_fallthru
      _
    // Predicated region
    $region26: #{tpu_custom_call.1} parent=1 // pred_check
      _
    $region27: #{tpu_custom_call.1} parent=1 // pred_check_branch
      %210 = sbr.rel (0) target = $region29
    $region28: #{tpu_custom_call.1} parent=1 // pred_region
      _
    $region29: #{tpu_custom_call.1} parent=1 // pred_fallthru
      _
    %211 = vsyncpa [#allocation3], 1
    %212 = vsyncpa [#allocation4], 1

</llo_original>
